<compile_context>
chip_gen: v5e
topology: v5e:2x2
jax: 0.10.0
libtpu: 0.0.40
codegen_flags: <defaults>
</compile_context>

<pallas_src>
import functools

import jax
import jax.numpy as jnp
from jax import lax
from jax.experimental import pallas as pl
from jax.experimental.pallas import tpu as pltpu

_MIB = 1024 * 1024


def _round_up(x, m):
    return ((x + m - 1) // m) * m


def _nan_euclidean_kernel(lhs_ref, rhs_ref, o_ref, *, dp, n_features, squared):
    """Compute one (tm, tn) tile of nan_euclidean_distances.

    lhs_ref: (tm, 3*dp) bf16 = [-2*Xc | XX | PX]
    rhs_ref: (tn, 3*dp) bf16 = [  Yc  | PY | YY]
    """
    dn = (((1,), (1,)), ((), ()))   # contract the feature axis of both sides

    lhs = lhs_ref[...]
    rhs = rhs_ref[...]

    # One deep-K bf16 MXU contraction gives the full corrected squared-distance
    # numerator:  -2*Xc.Yc^T + XX.PY^T + PX.YY^T   (f32 accumulation).
    dist = lax.dot_general(lhs, rhs, dn, preferred_element_type=jnp.float32)

    # present_count = PX.PY^T from static 128-aligned slices of the slabs.
    # 0/1 bf16 operands with f32 accumulation -> exact integer counts.
    pc = lax.dot_general(lhs[:, 2 * dp:3 * dp], rhs[:, dp:2 * dp], dn,
                         preferred_element_type=jnp.float32)

    dist = jnp.maximum(dist, 0.0)                  # clip(dist, 0, None)
    dist = jnp.where(pc == 0.0, jnp.nan, dist)     # no shared features -> NaN
    pc = jnp.maximum(pc, 1.0)
    # divide -> EUP reciprocal; fold the `* n_features` rescale in.
    dist = dist * (jnp.float32(n_features) * pl.reciprocal(pc, approx=True))
    if not squared:
        dist = jnp.sqrt(dist)

    o_ref[...] = dist.astype(o_ref.dtype)


def _prep_side(A, rows_pad, feat_pad):
    """NaN handling + zero padding for one operand. Returns (Ac, AA, present)."""
    miss = jnp.isnan(A)
    Ac = jnp.where(miss, 0.0, A).astype(jnp.float32)
    AA = Ac * Ac
    present = (~miss).astype(jnp.float32)
    pad = ((0, rows_pad - A.shape[0]), (0, feat_pad - A.shape[1]))
    return jnp.pad(Ac, pad), jnp.pad(AA, pad), jnp.pad(present, pad)


def nan_euclidean(X, Y, *, squared=False, tm=None, tn=None, force_tiled=False):
    """Pallas TPU implementation of sklearn nan_euclidean_distances
    (matches NanEuclidean.forward of the PyTorch module)."""
    X = jnp.asarray(X, jnp.float32)
    Y = jnp.asarray(Y, jnp.float32)
    M, D = X.shape
    N, D2 = Y.shape
    assert D == D2, "feature dims must match"

    Dp = _round_up(max(D, 1), 128)       # lane-dense per-segment width
    Dc = 3 * Dp                          # concatenated slab width (K axis)

    # ---- tile selection: 128-multiples, MXU-friendly, lane-dense output ----
    if tm is None:
        tm = min(512, _round_up(max(M, 1), 128))
    else:
        tm = _round_up(max(tm, 1), 128)
    if tn is None:
        tn = min(512, _round_up(max(N, 1), 128))
    else:
        tn = _round_up(max(tn, 1), 128)
    Mp = _round_up(max(M, 1), tm)
    Np = _round_up(max(N, 1), tn)

    # ---- one-time preprocessing (hoisted out of the kernel) ----
    Xc, XX, PX = _prep_side(X, Mp, Dp)
    Yc, YY, PY = _prep_side(Y, Np, Dp)
    lhs = jnp.concatenate([-2.0 * Xc, XX, PX], axis=1).astype(jnp.bfloat16)
    rhs = jnp.concatenate([Yc, PY, YY], axis=1).astype(jnp.bfloat16)

    kernel = functools.partial(_nan_euclidean_kernel,
                               dp=Dp, n_features=D, squared=squared)

    # ---- resident-RHS path: RHS slab stays in VMEM, DMA'd exactly once ----
    # Conservative footprint (double-buffer everything); budget is safe on
    # every generation (v7x has 64 MiB VMEM per TC).
    resident_need = 2 * tm * Dc * 2 + 2 * Np * Dc * 2 + 2 * tm * Np * 4
    if (not force_tiled) and resident_need <= 40 * _MIB:
        out = pl.pallas_call(
            kernel,
            out_shape=jax.ShapeDtypeStruct((Mp, Np), jnp.float32),
            grid_spec=pltpu.PrefetchScalarGridSpec(
                num_scalar_prefetch=0,
                grid=(Mp // tm,),
                in_specs=[
                    pl.BlockSpec((tm, Dc), lambda i: (i, 0)),   # LHS row-block
                    pl.BlockSpec((Np, Dc), lambda i: (0, 0)),   # RHS resident
                ],
                out_specs=pl.BlockSpec((tm, Np), lambda i: (i, 0)),
            ),
            compiler_params=pltpu.CompilerParams(
                dimension_semantics=("parallel",),
                vmem_limit_bytes=int(min(48 * _MIB,
                                         max(32 * _MIB,
                                             resident_need + 8 * _MIB))),
            ),
        )(lhs, rhs)
    else:
        # ---- 2-D tiled path: M leading (LHS-block reuse per core), both axes
        # parallel for megacore / 2-TC sharding. ----
        tiled_need = 2 * tm * Dc * 2 + 2 * tn * Dc * 2 + 2 * tm * tn * 4
        vmem_limit = int(min(96 * _MIB, max(32 * _MIB, tiled_need + 8 * _MIB)))
        out = pl.pallas_call(
            kernel,
            out_shape=jax.ShapeDtypeStruct((Mp, Np), jnp.float32),
            grid_spec=pltpu.PrefetchScalarGridSpec(
                num_scalar_prefetch=0,
                grid=(Mp // tm, Np // tn),
                in_specs=[
                    pl.BlockSpec((tm, Dc), lambda i, j: (i, 0)),   # LHS slab
                    pl.BlockSpec((tn, Dc), lambda i, j: (j, 0)),   # RHS slab
                ],
                out_specs=pl.BlockSpec((tm, tn), lambda i, j: (i, j)),
            ),
            compiler_params=pltpu.CompilerParams(
                dimension_semantics=("parallel", "parallel"),
                vmem_limit_bytes=vmem_limit,
            ),
        )(lhs, rhs)

    # drop padded rows/cols (their present_count is 0 -> NaN anyway)
    return out[:M, :N]


def _reference(X, Y, squared=False):
    """Pure-JAX (f32, highest precision) transcription of NanEuclidean.forward."""
    P = lax.Precision.HIGHEST
    X = jnp.asarray(X, jnp.float32)
    Y = jnp.asarray(Y, jnp.float32)
    miss_x = jnp.isnan(X)
    miss_y = jnp.isnan(Y)
    Xc = jnp.where(miss_x, 0.0, X)
    Yc = jnp.where(miss_y, 0.0, Y)
    XX = Xc * Xc
    YY = Yc * Yc
    d = (-2.0 * jnp.matmul(Xc, Yc.T, precision=P)
         + XX.sum(1, keepdims=True) + YY.sum(1, keepdims=True).T)
    d -= jnp.matmul(XX, miss_y.astype(jnp.float32).T, precision=P)
    d -= jnp.matmul(miss_x.astype(jnp.float32), YY.T, precision=P)
    d = jnp.maximum(d, 0.0)
    pc = jnp.matmul(1.0 - miss_x.astype(jnp.float32),
                    (1.0 - miss_y.astype(jnp.float32)).T, precision=P)
    d = jnp.where(pc == 0.0, jnp.nan, d)
    pc = jnp.maximum(pc, 1.0)
    d = d / pc * X.shape[1]
    if not squared:
        d = jnp.sqrt(d)
    return d


def _run_case(key, M, N, D, nan_rate=0.2, **kw):
    kx, ky, kmx, kmy = jax.random.split(key, 4)
    X = jax.random.normal(kx, (M, D), dtype=jnp.float32)
    Y = jax.random.normal(ky, (N, D), dtype=jnp.float32)
    X = jnp.where(jax.random.uniform(kmx, (M, D)) < nan_rate, jnp.nan, X)
    Y = jnp.where(jax.random.uniform(kmy, (N, D)) < nan_rate, jnp.nan, Y)

    out = jax.block_until_ready(nan_euclidean(X, Y, squared=False, **kw))
    ref = _reference(X, Y, squared=False)
    # bf16 slab operands (f32 accumulation) -> bf16-level tolerance vs the
    # f32/HIGHEST reference.
    ok = jnp.allclose(out, ref, rtol=3e-2, atol=2e-2, equal_nan=True)
    assert bool(ok), f"Pallas kernel mismatch for shape M={M}, N={N}, D={D}"


if __name__ == "__main__":
    key = jax.random.PRNGKey(0)
    k1, k2, k3 = jax.random.split(key, 3)

    # small shape consistent with the module (X rows-with-missing vs fit_X rows)
    _run_case(k1, M=16, N=16, D=32)
    # non-128-divisible shape exercising padding + resident-RHS path
    _run_case(k2, M=200, N=300, D=32)
    # force the 2-D tiled path (multi-block grid on both axes)
    _run_case(k3, M=300, N=640, D=32, tm=128, tn=256, force_tiled=True)

    print("KERNEL_OK")
</pallas_src>

<mosaic_0001>
module attributes {stable_mosaic.version = 11 : i64} {
  func.func @_nan_euclidean_kernel(%arg0: i32, %arg1: memref<128x384xbf16, #tpu.memory_space<vmem>>, %arg2: memref<128x384xbf16, #tpu.memory_space<vmem>>, %arg3: memref<128x128xf32, #tpu.memory_space<vmem>>) attributes {dimension_semantics = [#tpu.dimension_semantics<parallel>], iteration_bounds = array<i64: 1>, scalar_prefetch = 0 : i64, scratch_operands = 0 : i64, tpu.core_type = #tpu.core_type<tc>, window_params = [{transform_indices = @transform_0, window_bounds = array<i64: 128, 384>}, {pipeline_mode = #tpu.pipeline_mode<synchronous>, transform_indices = @transform_1, window_bounds = array<i64: 128, 384>}, {transform_indices = @transform_2, window_bounds = array<i64: 128, 128>}]} {
    %c0 = arith.constant 0 : index
    %c0_0 = arith.constant 0 : index
    %0 = vector.load %arg1[%c0, %c0_0] : memref<128x384xbf16, #tpu.memory_space<vmem>>, vector<128x384xbf16>
    %c0_1 = arith.constant 0 : index
    %c0_2 = arith.constant 0 : index
    %1 = vector.load %arg2[%c0_1, %c0_2] : memref<128x384xbf16, #tpu.memory_space<vmem>>, vector<128x384xbf16>
    %cst = arith.constant dense<0.000000e+00> : vector<128x128xf32>
    %2 = tpu.matmul %0, %1, %cst {dimension_numbers = #tpu.dot_dimension_numbers<[1], [1], [0], [0], [0, 0, 1, 0], [], []>} : vector<128x384xbf16>, vector<128x384xbf16>, vector<128x128xf32> -> vector<128x128xf32>
    %3 = vector.extract_strided_slice %0 {offsets = [0, 256], sizes = [128, 128], strides = [1, 1]} : vector<128x384xbf16> to vector<128x128xbf16>
    %4 = vector.extract_strided_slice %1 {offsets = [0, 128], sizes = [128, 128], strides = [1, 1]} : vector<128x384xbf16> to vector<128x128xbf16>
    %cst_3 = arith.constant dense<0.000000e+00> : vector<128x128xf32>
    %5 = tpu.matmul %3, %4, %cst_3 {dimension_numbers = #tpu.dot_dimension_numbers<[1], [1], [0], [0], [0, 0, 1, 0], [], []>} : vector<128x128xbf16>, vector<128x128xbf16>, vector<128x128xf32> -> vector<128x128xf32>
    %cst_4 = arith.constant 0.000000e+00 : f32
    %6 = vector.broadcast %cst_4 : f32 to vector<128x128xf32>
    %7 = arith.maximumf %2, %6 : vector<128x128xf32>
    %cst_5 = arith.constant 0.000000e+00 : f32
    %8 = vector.broadcast %cst_5 : f32 to vector<128x128xf32>
    %9 = arith.cmpf oeq, %5, %8 : vector<128x128xf32>
    %cst_6 = arith.constant 0x7FC00000 : f32
    %10 = vector.broadcast %cst_6 : f32 to vector<128x128xf32>
    %11 = arith.select %9, %10, %7 : vector<128x128xi1>, vector<128x128xf32>
    %cst_7 = arith.constant 1.000000e+00 : f32
    %12 = vector.broadcast %cst_7 : f32 to vector<128x128xf32>
    %13 = arith.maximumf %5, %12 : vector<128x128xf32>
    %14 = tpu.reciprocal %13 {approx = true} : vector<128x128xf32> -> vector<128x128xf32>
    %cst_8 = arith.constant 3.200000e+01 : f32
    %15 = vector.broadcast %cst_8 : f32 to vector<128x128xf32>
    %16 = arith.mulf %15, %14 : vector<128x128xf32>
    %17 = arith.mulf %11, %16 : vector<128x128xf32>
    %18 = math.sqrt %17 : vector<128x128xf32>
    %c0_9 = arith.constant 0 : index
    %c0_10 = arith.constant 0 : index
    %19 = vector.load %arg3[%c0_9, %c0_10] : memref<128x128xf32, #tpu.memory_space<vmem>>, vector<128x128xf32>
    tpu.vector_store %arg3[%c0_9, %c0_10], %18 {strides = array<i32>} : memref<128x128xf32, #tpu.memory_space<vmem>>, vector<128x128xf32>,
    return
  }
  func.func @transform_0(%arg0: i32) -> (i32, i32) {
    %c0_i32 = arith.constant 0 : i32
    %c0_i32_0 = arith.constant 0 : i32
    return %arg0, %c0_i32 : i32, i32
  }
  func.func @transform_1(%arg0: i32) -> (i32, i32) {
    %c0_i32 = arith.constant 0 : i32
    %c0_i32_0 = arith.constant 0 : i32
    %c0_i32_1 = arith.constant 0 : i32
    return %c0_i32, %c0_i32_0 : i32, i32
  }
  func.func @transform_2(%arg0: i32) -> (i32, i32) {
    %c0_i32 = arith.constant 0 : i32
    %c0_i32_0 = arith.constant 0 : i32
    return %arg0, %c0_i32 : i32, i32
  }
}

</mosaic_0001>

<llo_original>
// kernel: tpu_custom_call.1
$region0: #{tpu_custom_call.1}
  #allocation0 [shape = 'u32[]', space=smem, size = 0x4, offset = 0x4, fixed_abs, tag = 'smem constant byte address 0x4 - core index']
  #allocation1 [shape = 'u32[72,128]{1,0:T(1,128)}', space=vmem, size = 0x9000, scoped, tag = 'internal scratch']
  %s0 = inlined_call_operand.hbm [shape: bf16[128,384], index: 0, kind: input, shape index: {}]
  %s1 = inlined_call_operand.hbm [shape: bf16[128,384], index: 1, kind: input, shape index: {}]
  %s2 = inlined_call_operand.hbm [shape: f32[128,128], index: 2, kind: output, shape index: {}]
  %s3 = sld [smem:[#allocation0]]
  $region26: #{tpu_custom_call.1} parent=0
    _
  %s5 = ssub.s32 1, %s3
  %s6 = scalar_select 0, %s5, %s3
  $region1: #{tpu_custom_call.1} parent=0
    #allocation2 [shape = 'u8[98304]{0}', space=vmem, size = 0x18000, scoped, tag = 'input window, operand 0, single buffered']
    #allocation3 [shape = 's32[1]{0}', space=sflag, size = 0x4, scoped, tag = 'scoped memory for tpu_custom_call.1']
    #allocation4 [shape = 's32[1]{0}', space=sflag, size = 0x4, scoped, tag = 'scoped memory for tpu_custom_call.1']
    #allocation5 [shape = 'u8[98304]{0}', space=vmem, size = 0x18000, scoped, tag = 'input window, operand 1, single buffered']
    #allocation6 [shape = 's32[1]{0}', space=sflag, size = 0x4, scoped, tag = 'scoped memory for tpu_custom_call.1']
    #allocation7 [shape = 'u8[65536]{0}', space=vmem, size = 0x10000, scoped, tag = 'output window, operand 0, single buffered']
    %7 = vsyncpa [#allocation3], 0
    %8 = vsyncpa [#allocation6], 0
    %9 = vsyncpa [#allocation4], 0
    // Predicated region
    $region2: #{tpu_custom_call.1} parent=1 // pred_check
      _
    $region3: #{tpu_custom_call.1} parent=1 // pred_check_branch
      %11 = sbr.rel (0) target = $region5
    $region4: #{tpu_custom_call.1} parent=1 // pred_region
      %13 = vsyncadd [#allocation3], 0
      %s14 = sshll.u32 %s0, 4
      %s15 = int_to_ptr.hbm [resolvable:$true] %s14
      %s16 = sshll.u32 [#allocation2], 4
      %s17 = int_to_ptr.vmem [resolvable:$true] %s16
      %22 = dma.hbm_to_vmem [thread:$0]  %s15, 3072, %s17, [#allocation3], 192, 192, 12
    $region5: #{tpu_custom_call.1} parent=1 // pred_fallthru
      _
    // Predicated region
    $region6: #{tpu_custom_call.1} parent=1 // pred_check
      _
    $region7: #{tpu_custom_call.1} parent=1 // pred_check_branch
      %24 = sbr.rel (0) target = $region9
    $region8: #{tpu_custom_call.1} parent=1 // pred_region
      %26 = vsyncadd [#allocation6], 0
      %s27 = sshll.u32 %s1, 4
      %s28 = int_to_ptr.hbm [resolvable:$true] %s27
      %s29 = sshll.u32 [#allocation5], 4
      %s30 = int_to_ptr.vmem [resolvable:$true] %s29
      %35 = dma.hbm_to_vmem [thread:$0]  %s28, 3072, %s30, [#allocation6], 192, 192, 12
    $region9: #{tpu_custom_call.1} parent=1 // pred_fallthru
      _
    // Predicated region
    $region10: #{tpu_custom_call.1} parent=1 // pred_check
      _
    $region11: #{tpu_custom_call.1} parent=1 // pred_check_branch
      %37 = sbr.rel (0) target = $region13
    $region12: #{tpu_custom_call.1} parent=1 // pred_region
      %39 = dma.done [#allocation3], 3072
    $region13: #{tpu_custom_call.1} parent=1 // pred_fallthru
      _
    // Predicated region
    $region14: #{tpu_custom_call.1} parent=1 // pred_check
      _
    $region15: #{tpu_custom_call.1} parent=1 // pred_check_branch
      %41 = sbr.rel (0) target = $region17
    $region16: #{tpu_custom_call.1} parent=1 // pred_region
      %43 = dma.done [#allocation6], 3072
    $region17: #{tpu_custom_call.1} parent=1 // pred_fallthru
      _
    %v44 = vld [vmem:[#allocation2] sm:$0xff]
    %v45 = vld [vmem:[#allocation2 + $0x8] sm:$0xf]
    %v46 = vld [vmem:[#allocation2 + $0xc] sm:$0xff]
    %v47 = vld [vmem:[#allocation2 + $0x14] sm:$0xf]
    %v48 = vld [vmem:[#allocation2 + $0x18] sm:$0xff]
    %v49 = vld [vmem:[#allocation2 + $0x20] sm:$0xf]
    %v50 = vld [vmem:[#allocation2 + $0x24] sm:$0xff]
    %v51 = vld [vmem:[#allocation2 + $0x2c] sm:$0xf]
    %v52 = vld [vmem:[#allocation2 + $0x30] sm:$0xff]
    %v53 = vld [vmem:[#allocation2 + $0x38] sm:$0xf]
    %v54 = vld [vmem:[#allocation2 + $0x3c] sm:$0xff]
    %v55 = vld [vmem:[#allocation2 + $0x44] sm:$0xf]
    %v56 = vld [vmem:[#allocation2 + $0x48] sm:$0xff]
    %v57 = vld [vmem:[#allocation2 + $0x50] sm:$0xf]
    %v58 = vld [vmem:[#allocation2 + $0x54] sm:$0xff]
    %v59 = vld [vmem:[#allocation2 + $0x5c] sm:$0xf]
    %v60 = vld [vmem:[#allocation2 + $0x60] sm:$0xff]
    %v61 = vld [vmem:[#allocation2 + $0x68] sm:$0xf]
    %v62 = vld [vmem:[#allocation2 + $0x6c] sm:$0xff]
    %v63 = vld [vmem:[#allocation2 + $0x74] sm:$0xf]
    %v64 = vld [vmem:[#allocation2 + $0x78] sm:$0xff]
    %v65 = vld [vmem:[#allocation2 + $0x80] sm:$0xf]
    %v66 = vld [vmem:[#allocation2 + $0x84] sm:$0xff]
    %v67 = vld [vmem:[#allocation2 + $0x8c] sm:$0xf]
    %v68 = vld [vmem:[#allocation2 + $0x90] sm:$0xff]
    %v69 = vld [vmem:[#allocation2 + $0x98] sm:$0xf]
    %v70 = vld [vmem:[#allocation2 + $0x9c] sm:$0xff]
    %v71 = vld [vmem:[#allocation2 + $0xa4] sm:$0xf]
    %v72 = vld [vmem:[#allocation2 + $0xa8] sm:$0xff]
    %v73 = vld [vmem:[#allocation2 + $0xb0] sm:$0xf]
    %v74 = vld [vmem:[#allocation2 + $0xb4] sm:$0xff]
    %v75 = vld [vmem:[#allocation2 + $0xbc] sm:$0xf]
    %v76 = vld [vmem:[#allocation5] sm:$0xff]
    %v77 = vld [vmem:[#allocation5 + $0x8] sm:$0xf]
    %v78 = vld [vmem:[#allocation5 + $0xc] sm:$0xff]
    %v79 = vld [vmem:[#allocation5 + $0x14] sm:$0xf]
    %v80 = vld [vmem:[#allocation5 + $0x18] sm:$0xff]
    %v81 = vld [vmem:[#allocation5 + $0x20] sm:$0xf]
    %v82 = vld [vmem:[#allocation5 + $0x24] sm:$0xff]
    %v83 = vld [vmem:[#allocation5 + $0x2c] sm:$0xf]
    %v84 = vld [vmem:[#allocation5 + $0x30] sm:$0xff]
    %v85 = vld [vmem:[#allocation5 + $0x38] sm:$0xf]
    %v86 = vld [vmem:[#allocation5 + $0x3c] sm:$0xff]
    %v87 = vld [vmem:[#allocation5 + $0x44] sm:$0xf]
    %v88 = vld [vmem:[#allocation5 + $0x48] sm:$0xff]
    %v89 = vld [vmem:[#allocation5 + $0x50] sm:$0xf]
    %v90 = vld [vmem:[#allocation5 + $0x54] sm:$0xff]
    %v91 = vld [vmem:[#allocation5 + $0x5c] sm:$0xf]
    %v92 = vld [vmem:[#allocation5 + $0x60] sm:$0xff]
    %v93 = vld [vmem:[#allocation5 + $0x68] sm:$0xf]
    %v94 = vld [vmem:[#allocation5 + $0x6c] sm:$0xff]
    %v95 = vld [vmem:[#allocation5 + $0x74] sm:$0xf]
    %v96 = vld [vmem:[#allocation5 + $0x78] sm:$0xff]
    %v97 = vld [vmem:[#allocation5 + $0x80] sm:$0xf]
    %v98 = vld [vmem:[#allocation5 + $0x84] sm:$0xff]
    %v99 = vld [vmem:[#allocation5 + $0x8c] sm:$0xf]
    %v100 = vld [vmem:[#allocation5 + $0x90] sm:$0xff]
    %v101 = vld [vmem:[#allocation5 + $0x98] sm:$0xf]
    %v102 = vld [vmem:[#allocation5 + $0x9c] sm:$0xff]
    %v103 = vld [vmem:[#allocation5 + $0xa4] sm:$0xf]
    %v104 = vld [vmem:[#allocation5 + $0xa8] sm:$0xff]
    %v105 = vld [vmem:[#allocation5 + $0xb0] sm:$0xf]
    %v106 = vld [vmem:[#allocation5 + $0xb4] sm:$0xff]
    %v107 = vld [vmem:[#allocation5 + $0xbc] sm:$0xf]
    %v140 = vunpack.c.l.b16 %v44
    %v141 = vunpack.c.h.b16 %v44
    %v142 = vunpack.c.l.b16 %v45
    %v143 = vunpack.c.l.b16 %v46
    %v144 = vunpack.c.h.b16 %v46
    %v145 = vunpack.c.l.b16 %v47
    %v146 = vunpack.c.l.b16 %v48
    %v147 = vunpack.c.h.b16 %v48
    %v148 = vunpack.c.l.b16 %v49
    %v149 = vunpack.c.l.b16 %v50
    %v150 = vunpack.c.h.b16 %v50
    %v151 = vunpack.c.l.b16 %v51
    %v152 = vunpack.c.l.b16 %v52
    %v153 = vunpack.c.h.b16 %v52
    %v154 = vunpack.c.l.b16 %v53
    %v155 = vunpack.c.l.b16 %v54
    %v156 = vunpack.c.h.b16 %v54
    %v157 = vunpack.c.l.b16 %v55
    %v158 = vunpack.c.l.b16 %v56
    %v159 = vunpack.c.h.b16 %v56
    %v160 = vunpack.c.l.b16 %v57
    %v161 = vunpack.c.l.b16 %v58
    %v162 = vunpack.c.h.b16 %v58
    %v163 = vunpack.c.l.b16 %v59
    %v164 = vunpack.c.l.b16 %v60
    %v165 = vunpack.c.h.b16 %v60
    %v166 = vunpack.c.l.b16 %v61
    %v167 = vunpack.c.l.b16 %v62
    %v168 = vunpack.c.h.b16 %v62
    %v169 = vunpack.c.l.b16 %v63
    %v170 = vunpack.c.l.b16 %v64
    %v171 = vunpack.c.h.b16 %v64
    %v172 = vunpack.c.l.b16 %v65
    %v173 = vunpack.c.l.b16 %v66
    %v174 = vunpack.c.h.b16 %v66
    %v175 = vunpack.c.l.b16 %v67
    %v176 = vunpack.c.l.b16 %v68
    %v177 = vunpack.c.h.b16 %v68
    %v178 = vunpack.c.l.b16 %v69
    %v179 = vunpack.c.l.b16 %v70
    %v180 = vunpack.c.h.b16 %v70
    %v181 = vunpack.c.l.b16 %v71
    %v182 = vunpack.c.l.b16 %v72
    %v183 = vunpack.c.h.b16 %v72
    %v184 = vunpack.c.l.b16 %v73
    %v185 = vunpack.c.l.b16 %v74
    %v186 = vunpack.c.h.b16 %v74
    %v187 = vunpack.c.l.b16 %v75
    %v188 = vpack.c.b16 %v143, %v140
    %v189 = vpack.c.b16 %v144, %v141
    %v190 = vpack.c.b16 %v145, %v142
    %v191 = vpack.c.b16 %v149, %v146
    %v192 = vpack.c.b16 %v150, %v147
    %v193 = vpack.c.b16 %v151, %v148
    %v194 = vpack.c.b16 %v155, %v152
    %v195 = vpack.c.b16 %v156, %v153
    %v196 = vpack.c.b16 %v157, %v154
    %v197 = vpack.c.b16 %v161, %v158
    %v198 = vpack.c.b16 %v162, %v159
    %v199 = vpack.c.b16 %v163, %v160
    %v200 = vpack.c.b16 %v167, %v164
    %v201 = vpack.c.b16 %v168, %v165
    %v202 = vpack.c.b16 %v169, %v166
    %v203 = vpack.c.b16 %v173, %v170
    %v204 = vpack.c.b16 %v174, %v171
    %v205 = vpack.c.b16 %v175, %v172
    %v206 = vpack.c.b16 %v179, %v176
    %v207 = vpack.c.b16 %v180, %v177
    %v208 = vpack.c.b16 %v181, %v178
    %v209 = vpack.c.b16 %v185, %v182
    %v210 = vpack.c.b16 %v186, %v183
    %v211 = vpack.c.b16 %v187, %v184
    %v268 = vunpack.c.l.b16 %v76
    %v269 = vunpack.c.h.b16 %v76
    %v270 = vunpack.c.l.b16 %v77
    %v271 = vunpack.c.l.b16 %v78
    %v272 = vunpack.c.h.b16 %v78
    %v273 = vunpack.c.l.b16 %v79
    %v274 = vunpack.c.l.b16 %v80
    %v275 = vunpack.c.h.b16 %v80
    %v276 = vunpack.c.l.b16 %v81
    %v277 = vunpack.c.l.b16 %v82
    %v278 = vunpack.c.h.b16 %v82
    %v279 = vunpack.c.l.b16 %v83
    %v280 = vunpack.c.l.b16 %v84
    %v281 = vunpack.c.h.b16 %v84
    %v282 = vunpack.c.l.b16 %v85
    %v283 = vunpack.c.l.b16 %v86
    %v284 = vunpack.c.h.b16 %v86
    %v285 = vunpack.c.l.b16 %v87
    %v286 = vunpack.c.l.b16 %v88
    %v287 = vunpack.c.h.b16 %v88
    %v288 = vunpack.c.l.b16 %v89
    %v289 = vunpack.c.l.b16 %v90
    %v290 = vunpack.c.h.b16 %v90
    %v291 = vunpack.c.l.b16 %v91
    %v292 = vunpack.c.l.b16 %v92
    %v293 = vunpack.c.h.b16 %v92
    %v294 = vunpack.c.l.b16 %v93
    %v295 = vunpack.c.l.b16 %v94
    %v296 = vunpack.c.h.b16 %v94
    %v297 = vunpack.c.l.b16 %v95
    %v298 = vunpack.c.l.b16 %v96
    %v299 = vunpack.c.h.b16 %v96
    %v300 = vunpack.c.l.b16 %v97
    %v301 = vunpack.c.l.b16 %v98
    %v302 = vunpack.c.h.b16 %v98
    %v303 = vunpack.c.l.b16 %v99
    %v304 = vunpack.c.l.b16 %v100
    %v305 = vunpack.c.h.b16 %v100
    %v306 = vunpack.c.l.b16 %v101
    %v307 = vunpack.c.l.b16 %v102
    %v308 = vunpack.c.h.b16 %v102
    %v309 = vunpack.c.l.b16 %v103
    %v310 = vunpack.c.l.b16 %v104
    %v311 = vunpack.c.h.b16 %v104
    %v312 = vunpack.c.l.b16 %v105
    %v313 = vunpack.c.l.b16 %v106
    %v314 = vunpack.c.h.b16 %v106
    %v315 = vunpack.c.l.b16 %v107
    %v316 = vpack.c.b16 %v271, %v268
    %v317 = vpack.c.b16 %v272, %v269
    %v318 = vpack.c.b16 %v273, %v270
    %v319 = vpack.c.b16 %v277, %v274
    %v320 = vpack.c.b16 %v278, %v275
    %v321 = vpack.c.b16 %v279, %v276
    %v322 = vpack.c.b16 %v283, %v280
    %v323 = vpack.c.b16 %v284, %v281
    %v324 = vpack.c.b16 %v285, %v282
    %v325 = vpack.c.b16 %v289, %v286
    %v326 = vpack.c.b16 %v290, %v287
    %v327 = vpack.c.b16 %v291, %v288
    %v328 = vpack.c.b16 %v295, %v292
    %v329 = vpack.c.b16 %v296, %v293
    %v330 = vpack.c.b16 %v297, %v294
    %v331 = vpack.c.b16 %v301, %v298
    %v332 = vpack.c.b16 %v302, %v299
    %v333 = vpack.c.b16 %v303, %v300
    %v334 = vpack.c.b16 %v307, %v304
    %v335 = vpack.c.b16 %v308, %v305
    %v336 = vpack.c.b16 %v309, %v306
    %v337 = vpack.c.b16 %v313, %v310
    %v338 = vpack.c.b16 %v314, %v311
    %v339 = vpack.c.b16 %v315, %v312
    %364 = vmatpush.bf16.xpose.msra.mxu0 %v337
    %365 = vmatpush.bf16.xpose.msra.mxu0 %v334
    %366 = vmatpush.bf16.xpose.msra.mxu0 %v331
    %367 = vmatpush.bf16.xpose.msra.mxu0 %v328
    %368 = vmatpush.bf16.xpose.msra.mxu0 %v325
    %369 = vmatpush.bf16.xpose.msra.mxu0 %v322
    %370 = vmatpush.bf16.xpose.msra.mxu0 %v319
    %371 = vmatpush.bf16.xpose.msra.mxu0 %v316
    %372 = vmatmul.bf16.gmra.mxu0 %v188
    %v373 = vpop.f32.mrf.mxu0
    %v374 = vadd.f32 0.0, %v373
    %v375 = vpop.f32.mrf.mxu0
    %v376 = vadd.f32 0.0, %v375
    %377 = vmatmul.bf16.gmra.mxu0 %v191
    %v378 = vpop.f32.mrf.mxu0
    %v379 = vadd.f32 0.0, %v378
    %v380 = vpop.f32.mrf.mxu0
    %v381 = vadd.f32 0.0, %v380
    %382 = vmatmul.bf16.gmra.mxu0 %v194
    %v383 = vpop.f32.mrf.mxu0
    %v384 = vadd.f32 0.0, %v383
    %v385 = vpop.f32.mrf.mxu0
    %v386 = vadd.f32 0.0, %v385
    %387 = vmatmul.bf16.gmra.mxu0 %v197
    %v388 = vpop.f32.mrf.mxu0
    %v389 = vadd.f32 0.0, %v388
    %v390 = vpop.f32.mrf.mxu0
    %v391 = vadd.f32 0.0, %v390
    %392 = vmatmul.bf16.gmra.mxu0 %v200
    %v393 = vpop.f32.mrf.mxu0
    %v394 = vadd.f32 0.0, %v393
    %v395 = vpop.f32.mrf.mxu0
    %v396 = vadd.f32 0.0, %v395
    %397 = vmatmul.bf16.gmra.mxu0 %v203
    %v398 = vpop.f32.mrf.mxu0
    %v399 = vadd.f32 0.0, %v398
    %v400 = vpop.f32.mrf.mxu0
    %v401 = vadd.f32 0.0, %v400
    %402 = vmatmul.bf16.gmra.mxu0 %v206
    %v403 = vpop.f32.mrf.mxu0
    %v404 = vadd.f32 0.0, %v403
    %v405 = vpop.f32.mrf.mxu0
    %v406 = vadd.f32 0.0, %v405
    %407 = vmatmul.bf16.gmra.mxu0 %v209
    %v408 = vpop.f32.mrf.mxu0
    %v409 = vadd.f32 0.0, %v408
    %v410 = vpop.f32.mrf.mxu0
    %v411 = vadd.f32 0.0, %v410
    %412 = vdwg.mxu0
    %413 = vmatpush.bf16.xpose.msra.mxu0 %v338
    %414 = vmatpush.bf16.xpose.msra.mxu0 %v335
    %415 = vmatpush.bf16.xpose.msra.mxu0 %v332
    %416 = vmatpush.bf16.xpose.msra.mxu0 %v329
    %417 = vmatpush.bf16.xpose.msra.mxu0 %v326
    %418 = vmatpush.bf16.xpose.msra.mxu0 %v323
    %419 = vmatpush.bf16.xpose.msra.mxu0 %v320
    %420 = vmatpush.bf16.xpose.msra.mxu0 %v317
    %421 = vmatmul.bf16.gmra.mxu0 %v189
    %v422 = vpop.f32.mrf.mxu0
    %v423 = vadd.f32 %v374, %v422
    %v424 = vpop.f32.mrf.mxu0
    %v425 = vadd.f32 %v376, %v424
    %426 = vmatmul.bf16.gmra.mxu0 %v192
    %v427 = vpop.f32.mrf.mxu0
    %v428 = vadd.f32 %v379, %v427
    %v429 = vpop.f32.mrf.mxu0
    %v430 = vadd.f32 %v381, %v429
    %431 = vmatmul.bf16.gmra.mxu0 %v195
    %v432 = vpop.f32.mrf.mxu0
    %v433 = vadd.f32 %v384, %v432
    %v434 = vpop.f32.mrf.mxu0
    %v435 = vadd.f32 %v386, %v434
    %436 = vmatmul.bf16.gmra.mxu0 %v198
    %v437 = vpop.f32.mrf.mxu0
    %v438 = vadd.f32 %v389, %v437
    %v439 = vpop.f32.mrf.mxu0
    %v440 = vadd.f32 %v391, %v439
    %441 = vmatmul.bf16.gmra.mxu0 %v201
    %v442 = vpop.f32.mrf.mxu0
    %v443 = vadd.f32 %v394, %v442
    %v444 = vpop.f32.mrf.mxu0
    %v445 = vadd.f32 %v396, %v444
    %446 = vmatmul.bf16.gmra.mxu0 %v204
    %v447 = vpop.f32.mrf.mxu0
    %v448 = vadd.f32 %v399, %v447
    %v449 = vpop.f32.mrf.mxu0
    %v450 = vadd.f32 %v401, %v449
    %451 = vmatmul.bf16.gmra.mxu0 %v207
    %v452 = vpop.f32.mrf.mxu0
    %v453 = vadd.f32 %v404, %v452
    %v454 = vpop.f32.mrf.mxu0
    %v455 = vadd.f32 %v406, %v454
    %456 = vmatmul.bf16.gmra.mxu0 %v210
    %v457 = vpop.f32.mrf.mxu0
    %v458 = vadd.f32 %v409, %v457
    %v459 = vpop.f32.mrf.mxu0
    %v460 = vadd.f32 %v411, %v459
    %461 = vdwg.mxu0
    %462 = vmatpush.bf16.xpose.msra.mxu0 %v339
    %463 = vmatpush.bf16.xpose.msra.mxu0 %v336
    %464 = vmatpush.bf16.xpose.msra.mxu0 %v333
    %465 = vmatpush.bf16.xpose.msra.mxu0 %v330
    %466 = vmatpush.bf16.xpose.msra.mxu0 %v327
    %467 = vmatpush.bf16.xpose.msra.mxu0 %v324
    %468 = vmatpush.bf16.xpose.msra.mxu0 %v321
    %469 = vmatpush.bf16.xpose.msra.mxu0 %v318
    %470 = vmatmul.bf16.gmra.mxu0 %v190
    %v471 = vpop.f32.mrf.mxu0
    %v472 = vadd.f32 %v423, %v471
    %v473 = vpop.f32.mrf.mxu0
    %v474 = vadd.f32 %v425, %v473
    %475 = vmatmul.bf16.gmra.mxu0 %v193
    %v476 = vpop.f32.mrf.mxu0
    %v477 = vadd.f32 %v428, %v476
    %v478 = vpop.f32.mrf.mxu0
    %v479 = vadd.f32 %v430, %v478
    %480 = vmatmul.bf16.gmra.mxu0 %v196
    %v481 = vpop.f32.mrf.mxu0
    %v482 = vadd.f32 %v433, %v481
    %v483 = vpop.f32.mrf.mxu0
    %v484 = vadd.f32 %v435, %v483
    %485 = vmatmul.bf16.gmra.mxu0 %v199
    %v486 = vpop.f32.mrf.mxu0
    %v487 = vadd.f32 %v438, %v486
    %v488 = vpop.f32.mrf.mxu0
    %v489 = vadd.f32 %v440, %v488
    %490 = vmatmul.bf16.gmra.mxu0 %v202
    %v491 = vpop.f32.mrf.mxu0
    %v492 = vadd.f32 %v443, %v491
    %v493 = vpop.f32.mrf.mxu0
    %v494 = vadd.f32 %v445, %v493
    %495 = vmatmul.bf16.gmra.mxu0 %v205
    %v496 = vpop.f32.mrf.mxu0
    %v497 = vadd.f32 %v448, %v496
    %v498 = vpop.f32.mrf.mxu0
    %v499 = vadd.f32 %v450, %v498
    %500 = vmatmul.bf16.gmra.mxu0 %v208
    %v501 = vpop.f32.mrf.mxu0
    %v502 = vadd.f32 %v453, %v501
    %v503 = vpop.f32.mrf.mxu0
    %v504 = vadd.f32 %v455, %v503
    %505 = vmatmul.bf16.gmra.mxu0 %v211
    %v506 = vpop.f32.mrf.mxu0
    %v507 = vadd.f32 %v458, %v506
    %v508 = vpop.f32.mrf.mxu0
    %v509 = vadd.f32 %v460, %v508
    %510 = vdwg.mxu0
    %511 = vmatpush.bf16.xpose.msra.mxu0 %v338
    %512 = vmatpush.bf16.xpose.msra.mxu0 %v335
    %513 = vmatpush.bf16.xpose.msra.mxu0 %v332
    %514 = vmatpush.bf16.xpose.msra.mxu0 %v329
    %515 = vmatpush.bf16.xpose.msra.mxu0 %v326
    %516 = vmatpush.bf16.xpose.msra.mxu0 %v323
    %517 = vmatpush.bf16.xpose.msra.mxu0 %v320
    %518 = vmatpush.bf16.xpose.msra.mxu0 %v317
    %519 = vmatmul.bf16.gmra.mxu0 %v190
    %v520 = vpop.f32.mrf.mxu0
    %v521 = vadd.f32 0.0, %v520
    %v522 = vpop.f32.mrf.mxu0
    %v523 = vadd.f32 0.0, %v522
    %524 = vmatmul.bf16.gmra.mxu0 %v193
    %v525 = vpop.f32.mrf.mxu0
    %v526 = vadd.f32 0.0, %v525
    %v527 = vpop.f32.mrf.mxu0
    %v528 = vadd.f32 0.0, %v527
    %529 = vmatmul.bf16.gmra.mxu0 %v196
    %v530 = vpop.f32.mrf.mxu0
    %v531 = vadd.f32 0.0, %v530
    %v532 = vpop.f32.mrf.mxu0
    %v533 = vadd.f32 0.0, %v532
    %534 = vmatmul.bf16.gmra.mxu0 %v199
    %v535 = vpop.f32.mrf.mxu0
    %v536 = vadd.f32 0.0, %v535
    %v537 = vpop.f32.mrf.mxu0
    %v538 = vadd.f32 0.0, %v537
    %539 = vmatmul.bf16.gmra.mxu0 %v202
    %v540 = vpop.f32.mrf.mxu0
    %v541 = vadd.f32 0.0, %v540
    %v542 = vpop.f32.mrf.mxu0
    %v543 = vadd.f32 0.0, %v542
    %544 = vmatmul.bf16.gmra.mxu0 %v205
    %v545 = vpop.f32.mrf.mxu0
    %v546 = vadd.f32 0.0, %v545
    %v547 = vpop.f32.mrf.mxu0
    %v548 = vadd.f32 0.0, %v547
    %549 = vmatmul.bf16.gmra.mxu0 %v208
    %v550 = vpop.f32.mrf.mxu0
    %v551 = vadd.f32 0.0, %v550
    %v552 = vpop.f32.mrf.mxu0
    %v553 = vadd.f32 0.0, %v552
    %554 = vmatmul.bf16.gmra.mxu0 %v211
    %v555 = vpop.f32.mrf.mxu0
    %v556 = vadd.f32 0.0, %v555
    %v557 = vpop.f32.mrf.mxu0
    %v558 = vadd.f32 0.0, %v557
    %559 = vdwg.mxu0
    %v560 = vmax.f32 %v472, 0.0
    %v561 = vmax.f32 %v474, 0.0
    %v562 = vmax.f32 %v477, 0.0
    %v563 = vmax.f32 %v479, 0.0
    %v564 = vmax.f32 %v482, 0.0
    %v565 = vmax.f32 %v484, 0.0
    %v566 = vmax.f32 %v487, 0.0
    %v567 = vmax.f32 %v489, 0.0
    %v568 = vmax.f32 %v492, 0.0
    %v569 = vmax.f32 %v494, 0.0
    %v570 = vmax.f32 %v497, 0.0
    %v571 = vmax.f32 %v499, 0.0
    %v572 = vmax.f32 %v502, 0.0
    %v573 = vmax.f32 %v504, 0.0
    %v574 = vmax.f32 %v507, 0.0
    %v575 = vmax.f32 %v509, 0.0
    %vm576 = vcmp.eq.f32.partialorder %v521, 0.0
    %vm577 = vcmp.eq.f32.partialorder %v523, 0.0
    %vm578 = vcmp.eq.f32.partialorder %v526, 0.0
    %vm579 = vcmp.eq.f32.partialorder %v528, 0.0
    %vm580 = vcmp.eq.f32.partialorder %v531, 0.0
    %vm581 = vcmp.eq.f32.partialorder %v533, 0.0
    %vm582 = vcmp.eq.f32.partialorder %v536, 0.0
    %vm583 = vcmp.eq.f32.partialorder %v538, 0.0
    %vm584 = vcmp.eq.f32.partialorder %v541, 0.0
    %vm585 = vcmp.eq.f32.partialorder %v543, 0.0
    %vm586 = vcmp.eq.f32.partialorder %v546, 0.0
    %vm587 = vcmp.eq.f32.partialorder %v548, 0.0
    %vm588 = vcmp.eq.f32.partialorder %v551, 0.0
    %vm589 = vcmp.eq.f32.partialorder %v553, 0.0
    %vm590 = vcmp.eq.f32.partialorder %v556, 0.0
    %vm591 = vcmp.eq.f32.partialorder %v558, 0.0
    %v592 = vsel %vm576, nan, %v560
    %v593 = vsel %vm577, nan, %v561
    %v594 = vsel %vm578, nan, %v562
    %v595 = vsel %vm579, nan, %v563
    %v596 = vsel %vm580, nan, %v564
    %v597 = vsel %vm581, nan, %v565
    %v598 = vsel %vm582, nan, %v566
    %v599 = vsel %vm583, nan, %v567
    %v600 = vsel %vm584, nan, %v568
    %v601 = vsel %vm585, nan, %v569
    %v602 = vsel %vm586, nan, %v570
    %v603 = vsel %vm587, nan, %v571
    %v604 = vsel %vm588, nan, %v572
    %v605 = vsel %vm589, nan, %v573
    %v606 = vsel %vm590, nan, %v574
    %v607 = vsel %vm591, nan, %v575
    %v608 = vmax.f32 %v521, 1.0
    %v609 = vmax.f32 %v523, 1.0
    %v610 = vmax.f32 %v526, 1.0
    %v611 = vmax.f32 %v528, 1.0
    %v612 = vmax.f32 %v531, 1.0
    %v613 = vmax.f32 %v533, 1.0
    %v614 = vmax.f32 %v536, 1.0
    %v615 = vmax.f32 %v538, 1.0
    %v616 = vmax.f32 %v541, 1.0
    %v617 = vmax.f32 %v543, 1.0
    %v618 = vmax.f32 %v546, 1.0
    %v619 = vmax.f32 %v548, 1.0
    %v620 = vmax.f32 %v551, 1.0
    %v621 = vmax.f32 %v553, 1.0
    %v622 = vmax.f32 %v556, 1.0
    %v623 = vmax.f32 %v558, 1.0
    %v624 = vrcp.pop %v608
    %v625 = vrcp.pop %v609
    %v626 = vrcp.pop %v610
    %v627 = vrcp.pop %v611
    %v628 = vrcp.pop %v612
    %v629 = vrcp.pop %v613
    %v630 = vrcp.pop %v614
    %v631 = vrcp.pop %v615
    %v632 = vrcp.pop %v616
    %v633 = vrcp.pop %v617
    %v634 = vrcp.pop %v618
    %v635 = vrcp.pop %v619
    %v636 = vrcp.pop %v620
    %v637 = vrcp.pop %v621
    %v638 = vrcp.pop %v622
    %v639 = vrcp.pop %v623
    %v640 = vmul.f32 %v624, 32.0
    %v641 = vmul.f32 %v625, 32.0
    %v642 = vmul.f32 %v626, 32.0
    %v643 = vmul.f32 %v627, 32.0
    %v644 = vmul.f32 %v628, 32.0
    %v645 = vmul.f32 %v629, 32.0
    %v646 = vmul.f32 %v630, 32.0
    %v647 = vmul.f32 %v631, 32.0
    %v648 = vmul.f32 %v632, 32.0
    %v649 = vmul.f32 %v633, 32.0
    %v650 = vmul.f32 %v634, 32.0
    %v651 = vmul.f32 %v635, 32.0
    %v652 = vmul.f32 %v636, 32.0
    %v653 = vmul.f32 %v637, 32.0
    %v654 = vmul.f32 %v638, 32.0
    %v655 = vmul.f32 %v639, 32.0
    %v656 = vmul.f32 %v592, %v640
    %v657 = vmul.f32 %v593, %v641
    %v658 = vmul.f32 %v594, %v642
    %v659 = vmul.f32 %v595, %v643
    %v660 = vmul.f32 %v596, %v644
    %v661 = vmul.f32 %v597, %v645
    %v662 = vmul.f32 %v598, %v646
    %v663 = vmul.f32 %v599, %v647
    %v664 = vmul.f32 %v600, %v648
    %v665 = vmul.f32 %v601, %v649
    %v666 = vmul.f32 %v602, %v650
    %v667 = vmul.f32 %v603, %v651
    %v668 = vmul.f32 %v604, %v652
    %v669 = vmul.f32 %v605, %v653
    %v670 = vmul.f32 %v606, %v654
    %v671 = vmul.f32 %v607, %v655
    %v672 = vrsqrt.pop %v656
    %v673 = vmul.f32 %v672, %v656
    %v674 = vmul.f32 %v673, %v672
    %v675 = vmul.f32 0.5, %v674
    %v676 = vsub.f32 1.5, %v675
    %v677 = vmul.f32 %v672, %v676
    %v678 = vmul.f32 %v656, %v677
    %vm679 = vcmp.eq.f32.partialorder %v656, inf
    %v680 = vsel %vm679, %v656, %v678
    %vm681 = vcmp.eq.f32.partialorder %v656, 0.0
    %v682 = vand.u32 %v656, 2147483648
    %v683 = vsel %vm681, %v682, %v680
    %v684 = vrsqrt.pop %v657
    %v685 = vmul.f32 %v684, %v657
    %v686 = vmul.f32 %v685, %v684
    %v687 = vmul.f32 0.5, %v686
    %v688 = vsub.f32 1.5, %v687
    %v689 = vmul.f32 %v684, %v688
    %v690 = vmul.f32 %v657, %v689
    %vm691 = vcmp.eq.f32.partialorder %v657, inf
    %v692 = vsel %vm691, %v657, %v690
    %vm693 = vcmp.eq.f32.partialorder %v657, 0.0
    %v694 = vand.u32 %v657, 2147483648
    %v695 = vsel %vm693, %v694, %v692
    %v696 = vrsqrt.pop %v658
    %v697 = vmul.f32 %v696, %v658
    %v698 = vmul.f32 %v697, %v696
    %v699 = vmul.f32 0.5, %v698
    %v700 = vsub.f32 1.5, %v699
    %v701 = vmul.f32 %v696, %v700
    %v702 = vmul.f32 %v658, %v701
    %vm703 = vcmp.eq.f32.partialorder %v658, inf
    %v704 = vsel %vm703, %v658, %v702
    %vm705 = vcmp.eq.f32.partialorder %v658, 0.0
    %v706 = vand.u32 %v658, 2147483648
    %v707 = vsel %vm705, %v706, %v704
    %v708 = vrsqrt.pop %v659
    %v709 = vmul.f32 %v708, %v659
    %v710 = vmul.f32 %v709, %v708
    %v711 = vmul.f32 0.5, %v710
    %v712 = vsub.f32 1.5, %v711
    %v713 = vmul.f32 %v708, %v712
    %v714 = vmul.f32 %v659, %v713
    %vm715 = vcmp.eq.f32.partialorder %v659, inf
    %v716 = vsel %vm715, %v659, %v714
    %vm717 = vcmp.eq.f32.partialorder %v659, 0.0
    %v718 = vand.u32 %v659, 2147483648
    %v719 = vsel %vm717, %v718, %v716
    %v720 = vrsqrt.pop %v660
    %v721 = vmul.f32 %v720, %v660
    %v722 = vmul.f32 %v721, %v720
    %v723 = vmul.f32 0.5, %v722
    %v724 = vsub.f32 1.5, %v723
    %v725 = vmul.f32 %v720, %v724
    %v726 = vmul.f32 %v660, %v725
    %vm727 = vcmp.eq.f32.partialorder %v660, inf
    %v728 = vsel %vm727, %v660, %v726
    %vm729 = vcmp.eq.f32.partialorder %v660, 0.0
    %v730 = vand.u32 %v660, 2147483648
    %v731 = vsel %vm729, %v730, %v728
    %v732 = vrsqrt.pop %v661
    %v733 = vmul.f32 %v732, %v661
    %v734 = vmul.f32 %v733, %v732
    %v735 = vmul.f32 0.5, %v734
    %v736 = vsub.f32 1.5, %v735
    %v737 = vmul.f32 %v732, %v736
    %v738 = vmul.f32 %v661, %v737
    %vm739 = vcmp.eq.f32.partialorder %v661, inf
    %v740 = vsel %vm739, %v661, %v738
    %vm741 = vcmp.eq.f32.partialorder %v661, 0.0
    %v742 = vand.u32 %v661, 2147483648
    %v743 = vsel %vm741, %v742, %v740
    %v744 = vrsqrt.pop %v662
    %v745 = vmul.f32 %v744, %v662
    %v746 = vmul.f32 %v745, %v744
    %v747 = vmul.f32 0.5, %v746
    %v748 = vsub.f32 1.5, %v747
    %v749 = vmul.f32 %v744, %v748
    %v750 = vmul.f32 %v662, %v749
    %vm751 = vcmp.eq.f32.partialorder %v662, inf
    %v752 = vsel %vm751, %v662, %v750
    %vm753 = vcmp.eq.f32.partialorder %v662, 0.0
    %v754 = vand.u32 %v662, 2147483648
    %v755 = vsel %vm753, %v754, %v752
    %v756 = vrsqrt.pop %v663
    %v757 = vmul.f32 %v756, %v663
    %v758 = vmul.f32 %v757, %v756
    %v759 = vmul.f32 0.5, %v758
    %v760 = vsub.f32 1.5, %v759
    %v761 = vmul.f32 %v756, %v760
    %v762 = vmul.f32 %v663, %v761
    %vm763 = vcmp.eq.f32.partialorder %v663, inf
    %v764 = vsel %vm763, %v663, %v762
    %vm765 = vcmp.eq.f32.partialorder %v663, 0.0
    %v766 = vand.u32 %v663, 2147483648
    %v767 = vsel %vm765, %v766, %v764
    %v768 = vrsqrt.pop %v664
    %v769 = vmul.f32 %v768, %v664
    %v770 = vmul.f32 %v769, %v768
    %v771 = vmul.f32 0.5, %v770
    %v772 = vsub.f32 1.5, %v771
    %v773 = vmul.f32 %v768, %v772
    %v774 = vmul.f32 %v664, %v773
    %vm775 = vcmp.eq.f32.partialorder %v664, inf
    %v776 = vsel %vm775, %v664, %v774
    %vm777 = vcmp.eq.f32.partialorder %v664, 0.0
    %v778 = vand.u32 %v664, 2147483648
    %v779 = vsel %vm777, %v778, %v776
    %v780 = vrsqrt.pop %v665
    %v781 = vmul.f32 %v780, %v665
    %v782 = vmul.f32 %v781, %v780
    %v783 = vmul.f32 0.5, %v782
    %v784 = vsub.f32 1.5, %v783
    %v785 = vmul.f32 %v780, %v784
    %v786 = vmul.f32 %v665, %v785
    %vm787 = vcmp.eq.f32.partialorder %v665, inf
    %v788 = vsel %vm787, %v665, %v786
    %vm789 = vcmp.eq.f32.partialorder %v665, 0.0
    %v790 = vand.u32 %v665, 2147483648
    %v791 = vsel %vm789, %v790, %v788
    %v792 = vrsqrt.pop %v666
    %v793 = vmul.f32 %v792, %v666
    %v794 = vmul.f32 %v793, %v792
    %v795 = vmul.f32 0.5, %v794
    %v796 = vsub.f32 1.5, %v795
    %v797 = vmul.f32 %v792, %v796
    %v798 = vmul.f32 %v666, %v797
    %vm799 = vcmp.eq.f32.partialorder %v666, inf
    %v800 = vsel %vm799, %v666, %v798
    %vm801 = vcmp.eq.f32.partialorder %v666, 0.0
    %v802 = vand.u32 %v666, 2147483648
    %v803 = vsel %vm801, %v802, %v800
    %v804 = vrsqrt.pop %v667
    %v805 = vmul.f32 %v804, %v667
    %v806 = vmul.f32 %v805, %v804
    %v807 = vmul.f32 0.5, %v806
    %v808 = vsub.f32 1.5, %v807
    %v809 = vmul.f32 %v804, %v808
    %v810 = vmul.f32 %v667, %v809
    %vm811 = vcmp.eq.f32.partialorder %v667, inf
    %v812 = vsel %vm811, %v667, %v810
    %vm813 = vcmp.eq.f32.partialorder %v667, 0.0
    %v814 = vand.u32 %v667, 2147483648
    %v815 = vsel %vm813, %v814, %v812
    %v816 = vrsqrt.pop %v668
    %v817 = vmul.f32 %v816, %v668
    %v818 = vmul.f32 %v817, %v816
    %v819 = vmul.f32 0.5, %v818
    %v820 = vsub.f32 1.5, %v819
    %v821 = vmul.f32 %v816, %v820
    %v822 = vmul.f32 %v668, %v821
    %vm823 = vcmp.eq.f32.partialorder %v668, inf
    %v824 = vsel %vm823, %v668, %v822
    %vm825 = vcmp.eq.f32.partialorder %v668, 0.0
    %v826 = vand.u32 %v668, 2147483648
    %v827 = vsel %vm825, %v826, %v824
    %v828 = vrsqrt.pop %v669
    %v829 = vmul.f32 %v828, %v669
    %v830 = vmul.f32 %v829, %v828
    %v831 = vmul.f32 0.5, %v830
    %v832 = vsub.f32 1.5, %v831
    %v833 = vmul.f32 %v828, %v832
    %v834 = vmul.f32 %v669, %v833
    %vm835 = vcmp.eq.f32.partialorder %v669, inf
    %v836 = vsel %vm835, %v669, %v834
    %vm837 = vcmp.eq.f32.partialorder %v669, 0.0
    %v838 = vand.u32 %v669, 2147483648
    %v839 = vsel %vm837, %v838, %v836
    %v840 = vrsqrt.pop %v670
    %v841 = vmul.f32 %v840, %v670
    %v842 = vmul.f32 %v841, %v840
    %v843 = vmul.f32 0.5, %v842
    %v844 = vsub.f32 1.5, %v843
    %v845 = vmul.f32 %v840, %v844
    %v846 = vmul.f32 %v670, %v845
    %vm847 = vcmp.eq.f32.partialorder %v670, inf
    %v848 = vsel %vm847, %v670, %v846
    %vm849 = vcmp.eq.f32.partialorder %v670, 0.0
    %v850 = vand.u32 %v670, 2147483648
    %v851 = vsel %vm849, %v850, %v848
    %v852 = vrsqrt.pop %v671
    %v853 = vmul.f32 %v852, %v671
    %v854 = vmul.f32 %v853, %v852
    %v855 = vmul.f32 0.5, %v854
    %v856 = vsub.f32 1.5, %v855
    %v857 = vmul.f32 %v852, %v856
    %v858 = vmul.f32 %v671, %v857
    %vm859 = vcmp.eq.f32.partialorder %v671, inf
    %v860 = vsel %vm859, %v671, %v858
    %vm861 = vcmp.eq.f32.partialorder %v671, 0.0
    %v862 = vand.u32 %v671, 2147483648
    %v863 = vsel %vm861, %v862, %v860
    %864 = vst [vmem:[#allocation7] sm:$0xff] %v683
    %865 = vst [vmem:[#allocation7 + $0x8] sm:$0xff] %v695
    %866 = vst [vmem:[#allocation7 + $0x10] sm:$0xff] %v707
    %867 = vst [vmem:[#allocation7 + $0x18] sm:$0xff] %v719
    %868 = vst [vmem:[#allocation7 + $0x20] sm:$0xff] %v731
    %869 = vst [vmem:[#allocation7 + $0x28] sm:$0xff] %v743
    %870 = vst [vmem:[#allocation7 + $0x30] sm:$0xff] %v755
    %871 = vst [vmem:[#allocation7 + $0x38] sm:$0xff] %v767
    %872 = vst [vmem:[#allocation7 + $0x40] sm:$0xff] %v779
    %873 = vst [vmem:[#allocation7 + $0x48] sm:$0xff] %v791
    %874 = vst [vmem:[#allocation7 + $0x50] sm:$0xff] %v803
    %875 = vst [vmem:[#allocation7 + $0x58] sm:$0xff] %v815
    %876 = vst [vmem:[#allocation7 + $0x60] sm:$0xff] %v827
    %877 = vst [vmem:[#allocation7 + $0x68] sm:$0xff] %v839
    %878 = vst [vmem:[#allocation7 + $0x70] sm:$0xff] %v851
    %879 = vst [vmem:[#allocation7 + $0x78] sm:$0xff] %v863
    // Predicated region
    $region18: #{tpu_custom_call.1} parent=1 // pred_check
      _
    $region19: #{tpu_custom_call.1} parent=1 // pred_check_branch
      %881 = sbr.rel (0) target = $region21
    $region20: #{tpu_custom_call.1} parent=1 // pred_region
      %883 = vsyncadd [#allocation4], 0
      %s884 = sshll.u32 [#allocation7], 4
      %s885 = int_to_ptr.vmem [resolvable:$true] %s884
      %s886 = sshll.u32 %s2, 4
      %s887 = int_to_ptr.hbm [resolvable:$true] %s886
      %892 = dma.vmem_to_hbm [thread:$0]  %s885, 2048, %s887, [#allocation4], 128, 128, 8
    $region21: #{tpu_custom_call.1} parent=1 // pred_fallthru
      _
    // Predicated region
    $region22: #{tpu_custom_call.1} parent=1 // pred_check
      _
    $region23: #{tpu_custom_call.1} parent=1 // pred_check_branch
      %894 = sbr.rel (0) target = $region25
    $region24: #{tpu_custom_call.1} parent=1 // pred_region
      %896 = dma.done [#allocation4], 2048
    $region25: #{tpu_custom_call.1} parent=1 // pred_fallthru
      _
    %897 = vsyncpa [#allocation3], 1
    %898 = vsyncpa [#allocation6], 1
    %899 = vsyncpa [#allocation4], 1

</llo_original>
